<compile_context>
chip_gen: v6e
topology: v6e:2x2x1
jax: 0.10.0
libtpu: 0.0.40
codegen_flags: <defaults>
</compile_context>

<pallas_src>
import jax
import jax.numpy as jnp
from jax.experimental import pallas as pl
from jax.experimental.pallas import tpu as pltpu


# ----------------------------------------------------------------------------
# Kernel bodies
# ----------------------------------------------------------------------------
def _gate_math(xc, xp, w1c, w1p, shift, w2, b2):
    """Per-pixel gate math. Operands f32; channels on sublanes, pixels on lanes."""
    # 1x1 conv #1 on concat([xc, xp]) as two matmuls (BN scale pre-folded).
    z = jnp.dot(w1c, xc, preferred_element_type=jnp.float32)        # [Cmid, TP]
    z = z + jnp.dot(w1p, xp, preferred_element_type=jnp.float32)
    h = jnp.maximum(z + shift, 0.0)                                  # BN shift + ReLU
    # 1x1 conv #2 + sigmoid -> gates.
    s = jnp.dot(w2, h, preferred_element_type=jnp.float32) + b2      # [Cc, TP]
    # Explicit exp + approximate reciprocal: both transcendentals ride the EUP
    # slot instead of an exact VALU divide.
    g = pl.reciprocal(1.0 + jnp.exp(-s), approx=True)
    out = xc * (1.0 + g)                                             # gated + skip
    return out, g


def _gating_kernel(xc_ref, xp_ref, w1c_ref, w1p_ref, shift_ref, w2_ref, b2_ref,
                   out_ref, gate_ref):
    out, g = _gate_math(
        xc_ref[...].astype(jnp.float32), xp_ref[...].astype(jnp.float32),
        w1c_ref[...], w1p_ref[...], shift_ref[...], w2_ref[...], b2_ref[...])
    out_ref[...] = out.astype(out_ref.dtype)
    gate_ref[...] = g.astype(gate_ref.dtype)


def _gating_kernel_no_gate(xc_ref, xp_ref, w1c_ref, w1p_ref, shift_ref, w2_ref,
                           b2_ref, out_ref):
    out, _ = _gate_math(
        xc_ref[...].astype(jnp.float32), xp_ref[...].astype(jnp.float32),
        w1c_ref[...], w1p_ref[...], shift_ref[...], w2_ref[...], b2_ref[...])
    out_ref[...] = out.astype(out_ref.dtype)


# ----------------------------------------------------------------------------
# Generation-aware tiling helpers
# ----------------------------------------------------------------------------
def _round_up(x, m):
    return ((x + m - 1) // m) * m


def _tpu_hw_info():
    """(physical per-core VMEM bytes, TensorCores per chip), with safe fallback."""
    vmem_cap = 64 << 20          # conservative (v7x-sized) fallback
    n_cores = 1
    try:
        info = pltpu.get_tpu_info()
        vmem_cap = int(getattr(info, "vmem_capacity_bytes", vmem_cap))
        n_cores = 0
        for attr in ("num_cores", "core_count", "num_tensorcores", "tensorcore_count"):
            v = getattr(info, attr, None)
            if v:
                n_cores = int(v)
                break
        if not n_cores:
            # Heuristic: only v7x-class parts have <= 64 MiB VMEM per core (2 TCs).
            n_cores = 2 if vmem_cap <= (96 << 20) else 1
    except Exception:            # interpret mode / older runtimes: keep fallbacks
        pass
    return vmem_cap, n_cores


def _per_pixel_bytes(cc, cp, cmid, in_dtype, out_dtype, gates_dtype, return_gates):
    """(HBM I/O bytes per pixel, f32 compute-scratch bytes per pixel)."""
    ib = jnp.dtype(in_dtype).itemsize
    ob = jnp.dtype(out_dtype).itemsize
    io = (cc + cp) * ib + cc * ob
    if return_gates:
        io += cc * jnp.dtype(gates_dtype).itemsize
    scratch = 4 * (cmid + cc)    # z/h and the gate pre-activation, f32
    return io, scratch


def _choose_pixel_tile(hw, n_batch, io_bpp, scratch_bpp, vmem_cap, n_cores,
                       cap=None):
    """Pixel tile: multiple of 128, as large as the VMEM budget allows."""
    hw128 = _round_up(hw, 128)
    # Byte budget for the double-buffered I/O working set: ~half the physical
    # VMEM minus headroom (=> ~24 MiB on v7x's 64 MiB, capped at 48 MiB on the
    # 128 MiB v5e/v6e parts).
    budget = min(max(vmem_cap // 2 - (8 << 20), 8 << 20), 48 << 20)
    tp_vmem = max(128, (budget // (2 * io_bpp + scratch_bpp)) // 128 * 128)
    tp = max(128, min(hw128, tp_vmem, 32768))
    if cap is not None:
        tp = max(128, min(tp, _round_up(cap, 128)))
    # Only split a single image into >=2 pixel tiles when there are multiple
    # TensorCores to feed (v7x); on single-TC parts this only adds step overhead.
    if n_cores >= 2 and n_batch == 1 and hw128 >= 256 and pl.cdiv(hw, tp) < 2:
        tp = max(128, min(tp, _round_up(pl.cdiv(hw128, 2), 128)))
    return tp


def _vmem_limit_bytes(tp, io_bpp, scratch_bpp, vmem_cap):
    need = 2 * tp * io_bpp + tp * scratch_bpp + (2 << 20)   # tiles + weights + margin
    ceiling = min(vmem_cap * 3 // 4, 96 << 20)              # <=48 MiB on 64-MiB v7x
    return int(min(max(need, 32 << 20), ceiling))


# ----------------------------------------------------------------------------
# pallas_call wrapper
# ----------------------------------------------------------------------------
def physics_guided_gating_fwd(xc, xp, w1c_t, w1p_t, shift, w2_t, b2, *,
                              return_gates=True, gates_dtype=None,
                              pixel_tile_cap=None):
    """xc: [N, Cc, HW], xp: [N, Cp, HW] (channels on sublanes, pixels on lanes)."""
    N, Cc, HW = xc.shape
    _, Cp, _ = xp.shape
    Cmid = w1c_t.shape[0]
    if gates_dtype is None:
        gates_dtype = xc.dtype

    vmem_cap, n_cores = _tpu_hw_info()
    io_bpp, scratch_bpp = _per_pixel_bytes(Cc, Cp, Cmid, xc.dtype, xc.dtype,
                                           gates_dtype, return_gates)
    tp = _choose_pixel_tile(HW, N, io_bpp, scratch_bpp, vmem_cap, n_cores,
                            cap=pixel_tile_cap)
    n_ptiles = pl.cdiv(HW, tp)
    vmem_limit = _vmem_limit_bytes(tp, io_bpp, scratch_bpp, vmem_cap)

    # No pad/slice HBM round-trips: a non-128-aligned H*W is handled by Pallas
    # as a ragged (partial) last pixel tile.  Garbage in the over-read tail only
    # feeds per-pixel math whose results land in lanes that are masked on store.
    def x_spec(c):
        # None squeezes the batch dim out of the kernel ref -> [c, tp] tiles.
        return pl.BlockSpec((None, c, tp), lambda n, p: (n, 0, p))

    def w_spec(shape):
        return pl.BlockSpec(shape, lambda n, p: (0, 0))

    in_specs = [
        x_spec(Cc),                 # xc tile            [Cc, tp]
        x_spec(Cp),                 # xp tile            [Cp, tp]
        w_spec((Cmid, Cc)),         # W1 (change part, BN-scaled)
        w_spec((Cmid, Cp)),         # W1 (physical part, BN-scaled)
        w_spec((Cmid, 1)),          # folded conv1 bias / BN shift
        w_spec((Cc, Cmid)),         # W2
        w_spec((Cc, 1)),            # b2
    ]
    out_block = pl.BlockSpec((None, Cc, tp), lambda n, p: (n, 0, p))

    if return_gates:
        kernel = _gating_kernel
        out_shape = (jax.ShapeDtypeStruct((N, Cc, HW), xc.dtype),
                     jax.ShapeDtypeStruct((N, Cc, HW), gates_dtype))
        out_specs = [out_block, out_block]
    else:
        kernel = _gating_kernel_no_gate
        out_shape = jax.ShapeDtypeStruct((N, Cc, HW), xc.dtype)
        out_specs = out_block

    res = pl.pallas_call(
        kernel,
        out_shape=out_shape,
        grid_spec=pltpu.PrefetchScalarGridSpec(
            num_scalar_prefetch=0,
            grid=(N, n_ptiles),
            in_specs=in_specs,
            out_specs=out_specs),
        compiler_params=pltpu.CompilerParams(
            dimension_semantics=("parallel", "parallel"),
            vmem_limit_bytes=vmem_limit),
    )(xc, xp, w1c_t, w1p_t, shift, w2_t, b2)

    if return_gates:
        return res[0], res[1]
    return res, None


# ----------------------------------------------------------------------------
# Module
# ----------------------------------------------------------------------------
class PhysicsGuidedGatingPallas:
    """JAX/Pallas port of PhysicsGuidedGating (inference-mode BatchNorm).

    gates_dtype defaults to bfloat16 (gates are ~28% of the HBM bytes of this
    bandwidth-bound kernel and are sigmoid outputs in [0, 1]); pass
    jnp.float32 for exact-dtype parity with the PyTorch module.
    """

    def __init__(self, change_channels, physical_channels, reduction=4,
                 key=None, eps=1e-5, gates_dtype=jnp.bfloat16):
        if key is None:
            key = jax.random.PRNGKey(0)
        self.cc = change_channels
        self.cp = physical_channels
        self.cmid = change_channels // reduction
        self.gates_dtype = gates_dtype

        k1, k2, k3, k4 = jax.random.split(key, 4)
        cin = self.cc + self.cp
        # Conv2d(cin, cmid, 1): stored as [cin, cmid]; Conv2d(cmid, cc, 1): [cmid, cc].
        w1 = jax.random.normal(k1, (cin, self.cmid), jnp.float32) * (1.0 / jnp.sqrt(cin))
        b1 = jax.random.normal(k2, (self.cmid,), jnp.float32) * 0.01
        w2 = jax.random.normal(k3, (self.cmid, self.cc), jnp.float32) * (1.0 / jnp.sqrt(self.cmid))
        b2 = jax.random.normal(k4, (self.cc,), jnp.float32) * 0.01

        # BatchNorm (eval): gamma=1, beta=0, running_mean=0, running_var=1.
        # Real checkpoints: fold their actual stats/affine the same way below.
        gamma = jnp.ones((self.cmid,), jnp.float32)
        beta = jnp.zeros((self.cmid,), jnp.float32)
        rmean = jnp.zeros((self.cmid,), jnp.float32)
        rvar = jnp.ones((self.cmid,), jnp.float32)
        inv_std = gamma / jnp.sqrt(rvar + eps)

        # Channels-on-sublane orientation + BN scale folded into conv1 weights.
        w1_t = w1.T * inv_std[:, None]          # [cmid, cin]
        self.w1c_t = w1_t[:, :self.cc]          # [cmid, cc]
        self.w1p_t = w1_t[:, self.cc:]          # [cmid, cp]
        self.shift = ((b1 - rmean) * inv_std + beta).reshape(self.cmid, 1)
        self.w2_t = w2.T                        # [cc, cmid]
        self.b2 = b2.reshape(self.cc, 1)

    def __call__(self, change_features, physical_features, return_gates=True,
                 pixel_tile_cap=None):
        # change_features: [N, Cc, H, W]; physical_features: [N, Cp, Hp, Wp] (NCHW).
        N, Cc, H, W = change_features.shape
        if physical_features.shape[2:] != (H, W):
            # antialias=False matches F.interpolate(mode='bilinear',
            # align_corners=False).
            physical_features = jax.image.resize(
                physical_features,
                (physical_features.shape[0], physical_features.shape[1], H, W),
                method="bilinear", antialias=False)

        # NCHW kept as-is; just flatten spatial (no transposes, no HBM round-trip).
        xc = change_features.reshape(N, Cc, H * W)
        xp = physical_features.reshape(N, self.cp, H * W)

        out, gates = physics_guided_gating_fwd(
            xc, xp, self.w1c_t, self.w1p_t, self.shift, self.w2_t, self.b2,
            return_gates=return_gates, gates_dtype=self.gates_dtype,
            pixel_tile_cap=pixel_tile_cap)

        out = out.reshape(N, Cc, H, W)
        if gates is not None:
            gates = gates.reshape(N, Cc, H, W)
        return out, gates


# ----------------------------------------------------------------------------
# Pure-JAX reference (same folded math, exact sigmoid) for sanity checks
# ----------------------------------------------------------------------------
def _reference(module, change_features, physical_features):
    N, Cc, H, W = change_features.shape
    if physical_features.shape[2:] != (H, W):
        physical_features = jax.image.resize(
            physical_features,
            (physical_features.shape[0], physical_features.shape[1], H, W),
            method="bilinear", antialias=False)
    xc = change_features.reshape(N, Cc, H * W)
    xp = physical_features.reshape(N, module.cp, H * W)
    hp = jax.lax.Precision.HIGHEST
    z = jnp.einsum("mc,ncp->nmp", module.w1c_t, xc, precision=hp)
    z = z + jnp.einsum("mq,nqp->nmp", module.w1p_t, xp, precision=hp)
    h = jnp.maximum(z + module.shift[None], 0.0)
    g = jax.nn.sigmoid(
        jnp.einsum("cm,nmp->ncp", module.w2_t, h, precision=hp) + module.b2[None])
    out = xc * (1.0 + g)
    return out.reshape(N, Cc, H, W), g.reshape(N, Cc, H, W)


if __name__ == "__main__":
    key = jax.random.PRNGKey(0)
    k_cf, k_pf, k_cf2, k_params = jax.random.split(key, 4)

    # Tolerances cover the approximate EUP reciprocal in the sigmoid and the
    # optional bf16 gates output (both << 1e-2 in practice).
    ATOL = RTOL = 1e-2

    # ---- Test 1: 128-aligned H*W, low-res physical features (resize path),
    #              bf16 gates.
    N, Cc, Cp, H, W = 2, 32, 16, 16, 16
    change_features = jax.random.normal(k_cf, (N, Cc, H, W), jnp.float32)
    physical_features = jax.random.normal(k_pf, (N, Cp, H // 2, W // 2), jnp.float32)

    module = PhysicsGuidedGatingPallas(change_channels=Cc, physical_channels=Cp,
                                       reduction=4, key=k_params,
                                       gates_dtype=jnp.bfloat16)

    out, gates = module(change_features, physical_features)
    out = jax.block_until_ready(out)
    gates = jax.block_until_ready(gates)

    out_ref, gates_ref = _reference(module, change_features, physical_features)
    assert out.shape == (N, Cc, H, W) and gates.shape == (N, Cc, H, W)
    assert gates.dtype == jnp.bfloat16
    assert jnp.allclose(out, out_ref, atol=ATOL, rtol=RTOL)
    assert jnp.allclose(gates.astype(jnp.float32), gates_ref, atol=ATOL, rtol=RTOL)

    # ---- Test 2: non-128-aligned H*W -> ragged last pixel tile (no pad/slice),
    #              f32 gates, small forced tile so the partial-block path runs.
    N2, H2, W2 = 1, 16, 20          # H*W = 320 = 2*128 + 64
    change_features2 = jax.random.normal(k_cf2, (N2, Cc, H2, W2), jnp.float32)
    physical_features2 = jax.random.normal(k_pf, (N2, Cp, H2, W2), jnp.float32)

    module_f32 = PhysicsGuidedGatingPallas(change_channels=Cc, physical_channels=Cp,
                                           reduction=4, key=k_params,
                                           gates_dtype=jnp.float32)
    out2, gates2 = module_f32(change_features2, physical_features2,
                              pixel_tile_cap=128)
    out2 = jax.block_until_ready(out2)
    gates2 = jax.block_until_ready(gates2)

    out2_ref, gates2_ref = _reference(module_f32, change_features2,
                                      physical_features2)
    assert out2.shape == (N2, Cc, H2, W2)
    assert bool(jnp.all(jnp.isfinite(out2))) and bool(jnp.all(jnp.isfinite(gates2)))
    assert jnp.allclose(out2, out2_ref, atol=ATOL, rtol=RTOL)
    assert jnp.allclose(gates2, gates2_ref, atol=ATOL, rtol=RTOL)

    # ---- Test 3: gate-free path (skips the gates HBM write entirely).
    out_only, no_gates = module(change_features, physical_features,
                                return_gates=False)
    out_only = jax.block_until_ready(out_only)
    assert no_gates is None
    assert jnp.allclose(out_only, out_ref, atol=ATOL, rtol=RTOL)

    print("KERNEL_OK")
</pallas_src>

<mosaic_0001>
module attributes {stable_mosaic.version = 11 : i64} {
  func.func @_gating_kernel(%arg0: i32, %arg1: i32, %arg2: memref<1x32x256xf32, #tpu.memory_space<vmem>>, %arg3: memref<1x16x256xf32, #tpu.memory_space<vmem>>, %arg4: memref<8x32xf32, #tpu.memory_space<vmem>>, %arg5: memref<8x16xf32, #tpu.memory_space<vmem>>, %arg6: memref<8x1xf32, #tpu.memory_space<vmem>>, %arg7: memref<32x8xf32, #tpu.memory_space<vmem>>, %arg8: memref<32x1xf32, #tpu.memory_space<vmem>>, %arg9: memref<1x32x256xf32, #tpu.memory_space<vmem>>, %arg10: memref<1x32x256xbf16, #tpu.memory_space<vmem>>) attributes {dimension_semantics = [#tpu.dimension_semantics<parallel>, #tpu.dimension_semantics<parallel>], iteration_bounds = array<i64: 2, 1>, scalar_prefetch = 0 : i64, scratch_operands = 0 : i64, tpu.core_type = #tpu.core_type<tc>, window_params = [{transform_indices = @transform_0, window_bounds = array<i64: 1, 32, 256>}, {transform_indices = @transform_1, window_bounds = array<i64: 1, 16, 256>}, {pipeline_mode = #tpu.pipeline_mode<synchronous>, transform_indices = @transform_2, window_bounds = array<i64: 8, 32>}, {pipeline_mode = #tpu.pipeline_mode<synchronous>, transform_indices = @transform_3, window_bounds = array<i64: 8, 16>}, {pipeline_mode = #tpu.pipeline_mode<synchronous>, transform_indices = @transform_4, window_bounds = array<i64: 8, 1>}, {pipeline_mode = #tpu.pipeline_mode<synchronous>, transform_indices = @transform_5, window_bounds = array<i64: 32, 8>}, {pipeline_mode = #tpu.pipeline_mode<synchronous>, transform_indices = @transform_6, window_bounds = array<i64: 32, 1>}, {transform_indices = @transform_7, window_bounds = array<i64: 1, 32, 256>}, {transform_indices = @transform_8, window_bounds = array<i64: 1, 32, 256>}]} {
    %c0 = arith.constant 0 : index
    %c0_0 = arith.constant 0 : index
    %c0_1 = arith.constant 0 : index
    %0 = vector.load %arg2[%c0, %c0_0, %c0_1] : memref<1x32x256xf32, #tpu.memory_space<vmem>>, vector<1x32x256xf32>
    %1 = vector.shape_cast %0 : vector<1x32x256xf32> to vector<32x256xf32>
    %c0_2 = arith.constant 0 : index
    %c0_3 = arith.constant 0 : index
    %c0_4 = arith.constant 0 : index
    %2 = vector.load %arg3[%c0_2, %c0_3, %c0_4] : memref<1x16x256xf32, #tpu.memory_space<vmem>>, vector<1x16x256xf32>
    %3 = vector.shape_cast %2 : vector<1x16x256xf32> to vector<16x256xf32>
    %c0_5 = arith.constant 0 : index
    %c0_6 = arith.constant 0 : index
    %4 = vector.load %arg4[%c0_5, %c0_6] : memref<8x32xf32, #tpu.memory_space<vmem>>, vector<8x32xf32>
    %c0_7 = arith.constant 0 : index
    %c0_8 = arith.constant 0 : index
    %5 = vector.load %arg5[%c0_7, %c0_8] : memref<8x16xf32, #tpu.memory_space<vmem>>, vector<8x16xf32>
    %c0_9 = arith.constant 0 : index
    %c0_10 = arith.constant 0 : index
    %6 = vector.load %arg6[%c0_9, %c0_10] : memref<8x1xf32, #tpu.memory_space<vmem>>, vector<8x1xf32>
    %c0_11 = arith.constant 0 : index
    %c0_12 = arith.constant 0 : index
    %7 = vector.load %arg7[%c0_11, %c0_12] : memref<32x8xf32, #tpu.memory_space<vmem>>, vector<32x8xf32>
    %c0_13 = arith.constant 0 : index
    %c0_14 = arith.constant 0 : index
    %8 = vector.load %arg8[%c0_13, %c0_14] : memref<32x1xf32, #tpu.memory_space<vmem>>, vector<32x1xf32>
    %cst = arith.constant dense<0.000000e+00> : vector<8x256xf32>
    %9 = tpu.matmul %4, %1, %cst {dimension_numbers = #tpu.dot_dimension_numbers<[1], [0], [0], [1], [0, 0, 1, 1], [], []>} : vector<8x32xf32>, vector<32x256xf32>, vector<8x256xf32> -> vector<8x256xf32>
    %cst_15 = arith.constant dense<0.000000e+00> : vector<8x256xf32>
    %10 = tpu.matmul %5, %3, %cst_15 {dimension_numbers = #tpu.dot_dimension_numbers<[1], [0], [0], [1], [0, 0, 1, 1], [], []>} : vector<8x16xf32>, vector<16x256xf32>, vector<8x256xf32> -> vector<8x256xf32>
    %11 = arith.addf %9, %10 : vector<8x256xf32>
    %12 = vector.broadcast %6 : vector<8x1xf32> to vector<8x256xf32>
    %13 = arith.addf %11, %12 : vector<8x256xf32>
    %cst_16 = arith.constant 0.000000e+00 : f32
    %14 = vector.broadcast %cst_16 : f32 to vector<8x256xf32>
    %15 = arith.maximumf %13, %14 : vector<8x256xf32>
    %cst_17 = arith.constant dense<0.000000e+00> : vector<32x256xf32>
    %16 = tpu.matmul %7, %15, %cst_17 {dimension_numbers = #tpu.dot_dimension_numbers<[1], [0], [0], [1], [0, 0, 1, 1], [], []>} : vector<32x8xf32>, vector<8x256xf32>, vector<32x256xf32> -> vector<32x256xf32>
    %17 = vector.broadcast %8 : vector<32x1xf32> to vector<32x256xf32>
    %18 = arith.addf %16, %17 : vector<32x256xf32>
    %cst_18 = arith.constant 0.000000e+00 : f32
    %19 = vector.broadcast %cst_18 : f32 to vector<32x256xf32>
    %20 = arith.subf %19, %18 : vector<32x256xf32>
    %21 = math.exp %20 : vector<32x256xf32>
    %cst_19 = arith.constant 1.000000e+00 : f32
    %22 = vector.broadcast %cst_19 : f32 to vector<32x256xf32>
    %23 = arith.addf %22, %21 : vector<32x256xf32>
    %24 = tpu.reciprocal %23 {approx = true} : vector<32x256xf32> -> vector<32x256xf32>
    %cst_20 = arith.constant 1.000000e+00 : f32
    %25 = vector.broadcast %cst_20 : f32 to vector<32x256xf32>
    %26 = arith.addf %25, %24 : vector<32x256xf32>
    %27 = arith.mulf %1, %26 : vector<32x256xf32>
    %c0_21 = arith.constant 0 : index
    %c0_22 = arith.constant 0 : index
    %c0_23 = arith.constant 0 : index
    %28 = vector.load %arg9[%c0_21, %c0_22, %c0_23] : memref<1x32x256xf32, #tpu.memory_space<vmem>>, vector<1x32x256xf32>
    %29 = vector.shape_cast %28 : vector<1x32x256xf32> to vector<32x256xf32>
    %30 = vector.shape_cast %27 : vector<32x256xf32> to vector<1x32x256xf32>
    tpu.vector_store %arg9[%c0_21, %c0_22, %c0_23], %30 {strides = array<i32>} : memref<1x32x256xf32, #tpu.memory_space<vmem>>, vector<1x32x256xf32>,
    %31 = arith.truncf %24 : vector<32x256xf32> to vector<32x256xbf16>
    %c0_24 = arith.constant 0 : index
    %c0_25 = arith.constant 0 : index
    %c0_26 = arith.constant 0 : index
    %32 = vector.load %arg10[%c0_24, %c0_25, %c0_26] : memref<1x32x256xbf16, #tpu.memory_space<vmem>>, vector<1x32x256xbf16>
    %33 = vector.shape_cast %32 : vector<1x32x256xbf16> to vector<32x256xbf16>
    %34 = vector.shape_cast %31 : vector<32x256xbf16> to vector<1x32x256xbf16>
    tpu.vector_store %arg10[%c0_24, %c0_25, %c0_26], %34 {strides = array<i32>} : memref<1x32x256xbf16, #tpu.memory_space<vmem>>, vector<1x32x256xbf16>,
    return
  }
  func.func @transform_0(%arg0: i32, %arg1: i32) -> (i32, i32, i32) {
    %c0_i32 = arith.constant 0 : i32
    %c0_i32_0 = arith.constant 0 : i32
    return %arg0, %c0_i32, %arg1 : i32, i32, i32
  }
  func.func @transform_1(%arg0: i32, %arg1: i32) -> (i32, i32, i32) {
    %c0_i32 = arith.constant 0 : i32
    %c0_i32_0 = arith.constant 0 : i32
    return %arg0, %c0_i32, %arg1 : i32, i32, i32
  }
  func.func @transform_2(%arg0: i32, %arg1: i32) -> (i32, i32) {
    %c0_i32 = arith.constant 0 : i32
    %c0_i32_0 = arith.constant 0 : i32
    %c0_i32_1 = arith.constant 0 : i32
    return %c0_i32, %c0_i32_0 : i32, i32
  }
  func.func @transform_3(%arg0: i32, %arg1: i32) -> (i32, i32) {
    %c0_i32 = arith.constant 0 : i32
    %c0_i32_0 = arith.constant 0 : i32
    %c0_i32_1 = arith.constant 0 : i32
    return %c0_i32, %c0_i32_0 : i32, i32
  }
  func.func @transform_4(%arg0: i32, %arg1: i32) -> (i32, i32) {
    %c0_i32 = arith.constant 0 : i32
    %c0_i32_0 = arith.constant 0 : i32
    %c0_i32_1 = arith.constant 0 : i32
    return %c0_i32, %c0_i32_0 : i32, i32
  }
  func.func @transform_5(%arg0: i32, %arg1: i32) -> (i32, i32) {
    %c0_i32 = arith.constant 0 : i32
    %c0_i32_0 = arith.constant 0 : i32
    %c0_i32_1 = arith.constant 0 : i32
    return %c0_i32, %c0_i32_0 : i32, i32
  }
  func.func @transform_6(%arg0: i32, %arg1: i32) -> (i32, i32) {
    %c0_i32 = arith.constant 0 : i32
    %c0_i32_0 = arith.constant 0 : i32
    %c0_i32_1 = arith.constant 0 : i32
    return %c0_i32, %c0_i32_0 : i32, i32
  }
  func.func @transform_7(%arg0: i32, %arg1: i32) -> (i32, i32, i32) {
    %c0_i32 = arith.constant 0 : i32
    %c0_i32_0 = arith.constant 0 : i32
    return %arg0, %c0_i32, %arg1 : i32, i32, i32
  }
  func.func @transform_8(%arg0: i32, %arg1: i32) -> (i32, i32, i32) {
    %c0_i32 = arith.constant 0 : i32
    %c0_i32_0 = arith.constant 0 : i32
    return %arg0, %c0_i32, %arg1 : i32, i32, i32
  }
}

</mosaic_0001>

<llo_original>
// kernel: tpu_custom_call.1
$region0: #{tpu_custom_call.1}
  #allocation0 [shape = 'u32[]', space=smem, size = 0x4, offset = 0x4, fixed_abs, tag = 'smem constant byte address 0x4 - core index']
  #allocation1 [shape = 'u32[144,128]{1,0:T(1,128)}', space=vmem, size = 0x12000, scoped, tag = 'internal scratch']
  %s0 = inlined_call_operand.hbm [shape: f32[2,32,256], index: 0, kind: input, shape index: {}]
  %s1 = inlined_call_operand.vmem [shape: f32[2,16,256], index: 1, kind: input, shape index: {}]
  %s2 = inlined_call_operand.vmem [shape: f32[8,32], index: 2, kind: input, shape index: {}]
  %s3 = inlined_call_operand.vmem [shape: f32[8,16], index: 3, kind: input, shape index: {}]
  %s4 = inlined_call_operand.vmem [shape: f32[8,1], index: 4, kind: input, shape index: {}]
  %s5 = inlined_call_operand.vmem [shape: f32[32,8], index: 5, kind: input, shape index: {}]
  %s6 = inlined_call_operand.vmem [shape: f32[32,1], index: 6, kind: input, shape index: {}]
  %s7 = inlined_call_operand.hbm [shape: f32[2,32,256], index: 7, kind: output, shape index: {0}]
  %s8 = inlined_call_operand.hbm [shape: bf16[2,32,256], index: 8, kind: output, shape index: {1}]
  %9 = xla_tuple %s7, %s8
  %s10 = sld [smem:[#allocation0]]
  $region73: #{tpu_custom_call.1} parent=0
    _
  %s12 = ssub.s32 1, %s10
  %s13 = scalar_select 0, %s12, %s10
  $region1: #{tpu_custom_call.1} parent=0
    #allocation2 [shape = 'u8[65536]{0}', space=vmem, size = 0x10000, scoped, tag = 'input window, operand 0']
    #allocation3 [shape = 's32[2]{0}', space=sflag, size = 0x8, scoped, tag = 'scoped memory for tpu_custom_call.1']
    #allocation4 [shape = 's32[2]{0}', space=sflag, size = 0x8, scoped, tag = 'scoped memory for tpu_custom_call.1']
    #allocation5 [shape = 'u8[65536]{0}', space=vmem, size = 0x10000, scoped, tag = 'output window, operand 0']
    #allocation6 [shape = 'u8[32768]{0}', space=vmem, size = 0x8000, scoped, tag = 'output window, operand 1']
    #allocation7 [shape = 's32[2]{0}', space=sflag, size = 0x8, scoped, tag = 'scoped memory for tpu_custom_call.1']
    %14 = vsyncpa [#allocation3], 0
    %s15 = scalar_lea.sflag [#allocation3], 1
    %16 = vsyncpa %s15, 0
    %17 = vsyncpa [#allocation4], 0
    %s18 = scalar_lea.sflag [#allocation4], 1
    %19 = vsyncpa %s18, 0
    %20 = vsyncpa [#allocation7], 0
    %s21 = scalar_lea.sflag [#allocation7], 1
    %22 = vsyncpa %s21, 0
    loop: start=0, step=1, limit=4
    $region2: #{tpu_custom_call.1} parent=1 // loop_pre_header
      _
    $region3: #{tpu_custom_call.1} parent=1 // loop_header
      %s24 = sphi 0, %s28
      %p25 = scmp.ge.s32.totalorder %s24, 4
      %s31 = sphi 0, %s43
      %s32 = sphi 0, %s39
      %s33 = sphi 0, %s31
      %s34 = sphi 0, %s32
      %s35 = sphi 0, %s33
      %s36 = sphi 0, %s34
      %s48 = sphi 0, %s50
      %s51 = sphi 0, %s48
      %s52 = sphi 0, %s51
      %s68 = sphi 0, %s52
      %s76 = sphi 0, %s78
      %s79 = sphi 0, %s76
      %s80 = sphi 0, %s79
      %s96 = sphi 0, %s80
      %s100 = sphi 0, %s100
      %s102 = sphi 0, %s100
      %s103 = sphi 0, %s102
      %s117 = sphi 0, %s103
      %s121 = sphi 0, %s121
      %s123 = sphi 0, %s121
      %s124 = sphi 0, %s123
      %s138 = sphi 0, %s124
      %s142 = sphi 0, %s142
      %s144 = sphi 0, %s142
      %s145 = sphi 0, %s144
      %s159 = sphi 0, %s145
      %s163 = sphi 0, %s163
      %s165 = sphi 0, %s163
      %s166 = sphi 0, %s165
      %s180 = sphi 0, %s166
      %s184 = sphi 0, %s184
      %s186 = sphi 0, %s184
      %s187 = sphi 0, %s186
      %s201 = sphi 0, %s187
      %s209 = sphi 0, %s211
      %s212 = sphi 0, %s209
      %s213 = sphi 0, %s212
      %s229 = sphi 0, %s213
      %s237 = sphi 0, %s239
      %s240 = sphi 0, %s237
      %s241 = sphi 0, %s240
      %s257 = sphi 0, %s241
    $region4: #{tpu_custom_call.1} parent=1 // loop_header_branch
      %27 = sbr.rel (%p25) target = $region8
    $region5: #{tpu_custom_call.1} parent=1 // loop_body
      %s29 = ssub.s32 %s24, 1
      %s30 = ssub.s32 %s24, 2
      %s37 = sadd.s32 1, %s32
      %p38 = scmp.ge.s32.totalorder %s37, 1
      %s39 = scalar_select %p38, 0, %s37
      %s40 = sadd.s32 1, %s31
      %s41 = scalar_select %p38, %s40, %s31
      %p42 = scmp.ge.s32.totalorder %s41, 2
      %s43 = scalar_select %p42, 0, %s41
      %s44 = ssub.s32 %s31, %s43
      %s45 = ssub.s32 %s32, %s39
      %s46 = sor.u32 %s44, %s45
      %p47 = scmp.eq.s32.totalorder %s46, 0
      %s49 = sadd.s32 %s48, 1
      %s50 = scalar_select %p47, %s48, %s49
      %p53 = pneg %p47
      %p54 = scmp.eq.s32.totalorder %s24, 1
      %p55 = por %p53, %p54
      %p56 = scmp.ne.s32.totalorder %s48, %s51
      %p57 = scmp.eq.s32.totalorder %s24, 0
      %p58 = por %p56, %p57
      %p59 = scmp.ne.s32.totalorder %s48, %s51
      %p60 = scmp.eq.s32.totalorder %s29, 1
      %p61 = por %p59, %p60
      %p62 = scmp.ne.s32.totalorder %s51, %s52
      %p63 = scmp.eq.s32.totalorder %s29, 0
      %p64 = por %p62, %p63
      %p65 = scmp.ne.s32.totalorder %s51, %s52
      %p66 = scmp.eq.s32.totalorder %s30, 1
      %p67 = por %p65, %p66
      %p69 = scmp.ne.s32.totalorder %s52, %s68
      %p70 = scmp.eq.s32.totalorder %s30, 0
      %p71 = por %p69, %p70
      %s72 = ssub.s32 %s31, %s43
      %s73 = ssub.s32 %s32, %s39
      %s74 = sor.u32 %s72, %s73
      %p75 = scmp.eq.s32.totalorder %s74, 0
      %s77 = sadd.s32 %s76, 1
      %s78 = scalar_select %p75, %s76, %s77
      %p81 = pneg %p75
      %p82 = scmp.eq.s32.totalorder %s24, 1
      %p83 = por %p81, %p82
      %p84 = scmp.ne.s32.totalorder %s76, %s79
      %p85 = scmp.eq.s32.totalorder %s24, 0
      %p86 = por %p84, %p85
      %p87 = scmp.ne.s32.totalorder %s76, %s79
      %p88 = scmp.eq.s32.totalorder %s29, 1
      %p89 = por %p87, %p88
      %p90 = scmp.ne.s32.totalorder %s79, %s80
      %p91 = scmp.eq.s32.totalorder %s29, 0
      %p92 = por %p90, %p91
      %p93 = scmp.ne.s32.totalorder %s79, %s80
      %p94 = scmp.eq.s32.totalorder %s30, 1
      %p95 = por %p93, %p94
      %p97 = scmp.ne.s32.totalorder %s80, %s96
      %p98 = scmp.eq.s32.totalorder %s30, 0
      %p99 = por %p97, %p98
      %s101 = sadd.s32 %s100, 1
      %p104 = scmp.eq.s32.totalorder %s24, 1
      %p105 = scmp.ne.s32.totalorder %s100, %s102
      %p106 = scmp.eq.s32.totalorder %s24, 0
      %p107 = por %p105, %p106
      %p108 = scmp.ne.s32.totalorder %s100, %s102
      %p109 = scmp.eq.s32.totalorder %s29, 1
      %p110 = por %p108, %p109
      %p111 = scmp.ne.s32.totalorder %s102, %s103
      %p112 = scmp.eq.s32.totalorder %s29, 0
      %p113 = por %p111, %p112
      %p114 = scmp.ne.s32.totalorder %s102, %s103
      %p115 = scmp.eq.s32.totalorder %s30, 1
      %p116 = por %p114, %p115
      %p118 = scmp.ne.s32.totalorder %s103, %s117
      %p119 = scmp.eq.s32.totalorder %s30, 0
      %p120 = por %p118, %p119
      %s122 = sadd.s32 %s121, 1
      %p125 = scmp.eq.s32.totalorder %s24, 1
      %p126 = scmp.ne.s32.totalorder %s121, %s123
      %p127 = scmp.eq.s32.totalorder %s24, 0
      %p128 = por %p126, %p127
      %p129 = scmp.ne.s32.totalorder %s121, %s123
      %p130 = scmp.eq.s32.totalorder %s29, 1
      %p131 = por %p129, %p130
      %p132 = scmp.ne.s32.totalorder %s123, %s124
      %p133 = scmp.eq.s32.totalorder %s29, 0
      %p134 = por %p132, %p133
      %p135 = scmp.ne.s32.totalorder %s123, %s124
      %p136 = scmp.eq.s32.totalorder %s30, 1
      %p137 = por %p135, %p136
      %p139 = scmp.ne.s32.totalorder %s124, %s138
      %p140 = scmp.eq.s32.totalorder %s30, 0
      %p141 = por %p139, %p140
      %s143 = sadd.s32 %s142, 1
      %p146 = scmp.eq.s32.totalorder %s24, 1
      %p147 = scmp.ne.s32.totalorder %s142, %s144
      %p148 = scmp.eq.s32.totalorder %s24, 0
      %p149 = por %p147, %p148
      %p150 = scmp.ne.s32.totalorder %s142, %s144
      %p151 = scmp.eq.s32.totalorder %s29, 1
      %p152 = por %p150, %p151
      %p153 = scmp.ne.s32.totalorder %s144, %s145
      %p154 = scmp.eq.s32.totalorder %s29, 0
      %p155 = por %p153, %p154
      %p156 = scmp.ne.s32.totalorder %s144, %s145
      %p157 = scmp.eq.s32.totalorder %s30, 1
      %p158 = por %p156, %p157
      %p160 = scmp.ne.s32.totalorder %s145, %s159
      %p161 = scmp.eq.s32.totalorder %s30, 0
      %p162 = por %p160, %p161
      %s164 = sadd.s32 %s163, 1
      %p167 = scmp.eq.s32.totalorder %s24, 1
      %p168 = scmp.ne.s32.totalorder %s163, %s165
      %p169 = scmp.eq.s32.totalorder %s24, 0
      %p170 = por %p168, %p169
      %p171 = scmp.ne.s32.totalorder %s163, %s165
      %p172 = scmp.eq.s32.totalorder %s29, 1
      %p173 = por %p171, %p172
      %p174 = scmp.ne.s32.totalorder %s165, %s166
      %p175 = scmp.eq.s32.totalorder %s29, 0
      %p176 = por %p174, %p175
      %p177 = scmp.ne.s32.totalorder %s165, %s166
      %p178 = scmp.eq.s32.totalorder %s30, 1
      %p179 = por %p177, %p178
      %p181 = scmp.ne.s32.totalorder %s166, %s180
      %p182 = scmp.eq.s32.totalorder %s30, 0
      %p183 = por %p181, %p182
      %s185 = sadd.s32 %s184, 1
      %p188 = scmp.eq.s32.totalorder %s24, 1
      %p189 = scmp.ne.s32.totalorder %s184, %s186
      %p190 = scmp.eq.s32.totalorder %s24, 0
      %p191 = por %p189, %p190
      %p192 = scmp.ne.s32.totalorder %s184, %s186
      %p193 = scmp.eq.s32.totalorder %s29, 1
      %p194 = por %p192, %p193
      %p195 = scmp.ne.s32.totalorder %s186, %s187
      %p196 = scmp.eq.s32.totalorder %s29, 0
      %p197 = por %p195, %p196
      %p198 = scmp.ne.s32.totalorder %s186, %s187
      %p199 = scmp.eq.s32.totalorder %s30, 1
      %p200 = por %p198, %p199
      %p202 = scmp.ne.s32.totalorder %s187, %s201
      %p203 = scmp.eq.s32.totalorder %s30, 0
      %p204 = por %p202, %p203
      %s205 = ssub.s32 %s31, %s43
      %s206 = ssub.s32 %s32, %s39
      %s207 = sor.u32 %s205, %s206
      %p208 = scmp.eq.s32.totalorder %s207, 0
      %s210 = sadd.s32 %s209, 1
      %s211 = scalar_select %p208, %s209, %s210
      %p214 = pneg %p208
      %p215 = scmp.eq.s32.totalorder %s24, 1
      %p216 = por %p214, %p215
      %p217 = scmp.ne.s32.totalorder %s209, %s212
      %p218 = scmp.eq.s32.totalorder %s24, 0
      %p219 = por %p217, %p218
      %p220 = scmp.ne.s32.totalorder %s209, %s212
      %p221 = scmp.eq.s32.totalorder %s29, 1
      %p222 = por %p220, %p221
      %p223 = scmp.ne.s32.totalorder %s212, %s213
      %p224 = scmp.eq.s32.totalorder %s29, 0
      %p225 = por %p223, %p224
      %p226 = scmp.ne.s32.totalorder %s212, %s213
      %p227 = scmp.eq.s32.totalorder %s30, 1
      %p228 = por %p226, %p227
      %p230 = scmp.ne.s32.totalorder %s213, %s229
      %p231 = scmp.eq.s32.totalorder %s30, 0
      %p232 = por %p230, %p231
      %s233 = ssub.s32 %s31, %s43
      %s234 = ssub.s32 %s32, %s39
      %s235 = sor.u32 %s233, %s234
      %p236 = scmp.eq.s32.totalorder %s235, 0
      %s238 = sadd.s32 %s237, 1
      %s239 = scalar_select %p236, %s237, %s238
      %p242 = pneg %p236
      %p243 = scmp.eq.s32.totalorder %s24, 1
      %p244 = por %p242, %p243
      %p245 = scmp.ne.s32.totalorder %s237, %s240
      %p246 = scmp.eq.s32.totalorder %s24, 0
      %p247 = por %p245, %p246
      %p248 = scmp.ne.s32.totalorder %s237, %s240
      %p249 = scmp.eq.s32.totalorder %s29, 1
      %p250 = por %p248, %p249
      %p251 = scmp.ne.s32.totalorder %s240, %s241
      %p252 = scmp.eq.s32.totalorder %s29, 0
      %p253 = por %p251, %p252
      %p254 = scmp.ne.s32.totalorder %s240, %s241
      %p255 = scmp.eq.s32.totalorder %s30, 1
      %p256 = por %p254, %p255
      %p258 = scmp.ne.s32.totalorder %s241, %s257
      %p259 = scmp.eq.s32.totalorder %s30, 0
      %p260 = por %p258, %p259
      %p261 = scmp.le.s32.totalorder 1, %s24
      %p262 = scmp.lt.s32.totalorder %s24, 3
      %p263 = pnand %p261, %p262
      %p264 = pneg %p263
      // Predicated region
      $region9: #{tpu_custom_call.1} parent=5 // pred_check
        _
      $region10: #{tpu_custom_call.1} parent=5 // pred_check_branch
        %266 = sbr.rel (%p263) target = $region12
      $region11: #{tpu_custom_call.1} parent=5 // pred_region
        %s267 = ssub.s32 %s24, 1
        // Predicated region
        $region13: #{tpu_custom_call.1} parent=11 // pred_check
          %p268 = pneg %p113
        $region14: #{tpu_custom_call.1} parent=11 // pred_check_branch
          %270 = sbr.rel (%p268) target = $region16
        $region15: #{tpu_custom_call.1} parent=11 // pred_region
          _
        $region16: #{tpu_custom_call.1} parent=11 // pred_fallthru
          _
        // Predicated region
        $region17: #{tpu_custom_call.1} parent=11 // pred_check
          %p271 = pneg %p134
        $region18: #{tpu_custom_call.1} parent=11 // pred_check_branch
          %273 = sbr.rel (%p271) target = $region20
        $region19: #{tpu_custom_call.1} parent=11 // pred_region
          _
        $region20: #{tpu_custom_call.1} parent=11 // pred_fallthru
          _
        // Predicated region
        $region21: #{tpu_custom_call.1} parent=11 // pred_check
          %p274 = pneg %p155
        $region22: #{tpu_custom_call.1} parent=11 // pred_check_branch
          %276 = sbr.rel (%p274) target = $region24
        $region23: #{tpu_custom_call.1} parent=11 // pred_region
          _
        $region24: #{tpu_custom_call.1} parent=11 // pred_fallthru
          _
        // Predicated region
        $region25: #{tpu_custom_call.1} parent=11 // pred_check
          %p277 = pneg %p176
        $region26: #{tpu_custom_call.1} parent=11 // pred_check_branch
          %279 = sbr.rel (%p277) target = $region28
        $region27: #{tpu_custom_call.1} parent=11 // pred_region
          _
        $region28: #{tpu_custom_call.1} parent=11 // pred_fallthru
          _
        // Predicated region
        $region29: #{tpu_custom_call.1} parent=11 // pred_check
          %p280 = pneg %p197
        $region30: #{tpu_custom_call.1} parent=11 // pred_check_branch
          %282 = sbr.rel (%p280) target = $region32
        $region31: #{tpu_custom_call.1} parent=11 // pred_region
          _
        $region32: #{tpu_custom_call.1} parent=11 // pred_fallthru
          _
      $region12: #{tpu_custom_call.1} parent=5 // pred_fallthru
        _
      %p283 = scmp.lt.s32.totalorder %s24, 2
      // Predicated region
      $region33: #{tpu_custom_call.1} parent=5 // pred_check
        %p284 = pneg %p283
      $region34: #{tpu_custom_call.1} parent=5 // pred_check_branch
        %286 = sbr.rel (%p284) target = $region36
      $region35: #{tpu_custom_call.1} parent=5 // pred_region
        // Predicated region
        $region37: #{tpu_custom_call.1} parent=35 // pred_check
          %p287 = pneg %p58
        $region38: #{tpu_custom_call.1} parent=35 // pred_check_branch
          %289 = sbr.rel (%p287) target = $region40
        $region39: #{tpu_custom_call.1} parent=35 // pred_region
          %s290 = sand.u32 %s48, 1
          %s291 = scalar_lea.sflag [#allocation3], %s290
          %s292 = sand.u32 %s48, 1
          %s293 = smul.addr %s292, 64
          %s294 = scalar_lea.vmem [#allocation2], %s293
          %s295 = smul.u32 2, %s32
          %s297 = ssub.s32 1024, 1024
          %298 = vsyncadd %s291, %s297
          %s299 = smul.addr %s31, 8
          %s300 = sadd.s32 %s295, %s299
          %s301 = smul.addr %s300, 128
          %s302 = scalar_lea.hbm %s0, %s301
          %s303 = sshll.u32 %s294, 4
          %s304 = int_to_ptr.vmem [resolvable:$true] %s303
          %309 = dma.hbm_to_vmem [thread:$0]  %s302, 1024, %s304, %s291, 256, 256, 16
        $region40: #{tpu_custom_call.1} parent=35 // pred_fallthru
          _
        // Predicated region
        $region41: #{tpu_custom_call.1} parent=35 // pred_check
          %p310 = pneg %p86
        $region42: #{tpu_custom_call.1} parent=35 // pred_check_branch
          %312 = sbr.rel (%p310) target = $region44
        $region43: #{tpu_custom_call.1} parent=35 // pred_region
          %s313 = smul.u32 2, %s32
          %p314 = scmp.lt.s32.totalorder %s31, 1
          %s315 = scalar_select %p314, %s31, 1
          %p316 = scmp.lt.s32.totalorder %s313, 1
          %s317 = scalar_select %p316, %s313, 1
          %s318 = smul.addr %s315, 4
          %s319 = sadd.s32 %s317, %s318
          %s320 = smul.addr %s319, 8
          %s321 = scalar_lea.vmem %s1, %s320
          %s322 = smul.u32 2, %s32
        $region44: #{tpu_custom_call.1} parent=35 // pred_fallthru
          _
      $region36: #{tpu_custom_call.1} parent=5 // pred_fallthru
        _
      %p323 = scmp.le.s32.totalorder 1, %s24
      %p324 = scmp.lt.s32.totalorder %s24, 3
      %p325 = pnand %p323, %p324
      %p326 = pneg %p325
      // Predicated region
      $region45: #{tpu_custom_call.1} parent=5 // pred_check
        _
      $region46: #{tpu_custom_call.1} parent=5 // pred_check_branch
        %328 = sbr.rel (%p325) target = $region48
      $region47: #{tpu_custom_call.1} parent=5 // pred_region
        %s329 = ssub.s32 %s24, 1
        %s330 = sand.u32 %s51, 1
        %s331 = scalar_lea.sflag [#allocation3], %s330
        %s332 = sand.u32 %s51, 1
        %s333 = smul.addr %s332, 64
        %s334 = scalar_lea.vmem [#allocation2], %s333
        // Predicated region
        $region49: #{tpu_custom_call.1} parent=47 // pred_check
          %p335 = pneg %p64
        $region50: #{tpu_custom_call.1} parent=47 // pred_check_branch
          %337 = sbr.rel (%p335) target = $region52
        $region51: #{tpu_custom_call.1} parent=47 // pred_region
          %338 = dma.done %s331, 1024
        $region52: #{tpu_custom_call.1} parent=47 // pred_fallthru
          _
        %s339 = sand.u32 %s51, 1
        %s340 = scalar_lea.sflag [#allocation3], %s339
        %s341 = sand.u32 %s51, 1
        %s342 = smul.addr %s341, 64
        %s343 = scalar_lea.vmem [#allocation2], %s342
        %p344 = pneg %p64
        %p345 = pneg %p61
        %s346 = smul.u32 2, %s34
        %p347 = scmp.lt.s32.totalorder %s33, 1
        %s348 = scalar_select %p347, %s33, 1
        %p349 = scmp.lt.s32.totalorder %s346, 1
        %s350 = scalar_select %p349, %s346, 1
        %s351 = smul.addr %s348, 4
        %s352 = sadd.s32 %s350, %s351
        %s353 = smul.addr %s352, 8
        %s354 = scalar_lea.vmem %s1, %s353
        %p355 = pneg %p92
        %p356 = pneg %p89
        %p357 = pneg %p113
        %p358 = pneg %p110
        %p359 = pneg %p134
        %p360 = pneg %p131
        %p361 = pneg %p155
        %p362 = pneg %p152
        %p363 = pneg %p176
        %p364 = pneg %p173
        %p365 = pneg %p197
        %p366 = pneg %p194
        %p367 = pneg %p225
        %p368 = pneg %p222
        %s369 = sand.u32 %s212, 1
        %s370 = scalar_lea.sflag [#allocation4], %s369
        %s371 = sand.u32 %s212, 1
        %s372 = smul.addr %s371, 64
        %s373 = scalar_lea.vmem [#allocation5], %s372
        %p374 = pneg %p253
        %p375 = pneg %p250
        %s376 = sand.u32 %s240, 1
        %s377 = scalar_lea.sflag [#allocation7], %s376
        %s378 = sand.u32 %s240, 1
        %s379 = smul.addr %s378, 32
        %s380 = scalar_lea.vmem [#allocation6], %s379
        %s381 = smul.u32 2, %s34
        %s382 = smul.u32 2, %s34
        %p383 = scmp.lt.s32.totalorder %s33, 1
        %s384 = scalar_select %p383, %s33, 1
        %p385 = scmp.lt.s32.totalorder %s382, 1
        %s386 = scalar_select %p385, %s382, 1
        %s387 = smul.addr %s384, 4
        %s388 = sadd.s32 %s386, %s387
        %s389 = smul.addr %s388, 8
        %s390 = scalar_lea.vmem %s1, %s389
        %s391 = smul.u32 2, %s34
        %s392 = smul.u32 2, %s34
        %s393 = smul.u32 2, %s34
        %v394 = vld [vmem:[%s334] sm:$0xff]
        %v395 = vld [vmem:[%s334 + $0x8] sm:$0xff]
        %v396 = vld [vmem:[%s334 + $0x10] sm:$0xff]
        %v397 = vld [vmem:[%s334 + $0x18] sm:$0xff]
        %v398 = vld [vmem:[%s334 + $0x20] sm:$0xff]
        %v399 = vld [vmem:[%s334 + $0x28] sm:$0xff]
        %v400 = vld [vmem:[%s334 + $0x30] sm:$0xff]
        %v401 = vld [vmem:[%s334 + $0x38] sm:$0xff]
        %v402 = vld [vmem:[%s390] sm:$0xff]
        %v403 = vld [vmem:[%s390 + $0x8] sm:$0xff]
        %v404 = vld [vmem:[%s390 + $0x10] sm:$0xff]
        %v405 = vld [vmem:[%s390 + $0x18] sm:$0xff]
        %v406 = vld [vmem:[%s2] sm:$0xff]
        %v407 = vld [vmem:[%s3] sm:$0xff]
        %v408 = vld [vmem:[%s4] sm:$0xff]
        %v409 = vld [vmem:[%s5] sm:$0xff]
        %v410 = vld [vmem:[%s5 + $0x8] sm:$0xff]
        %v411 = vld [vmem:[%s5 + $0x10] sm:$0xff]
        %v412 = vld [vmem:[%s5 + $0x18] sm:$0xff]
        %v413 = vld [vmem:[%s6] sm:$0xff]
        %v414 = vld [vmem:[%s6 + $0x8] sm:$0xff]
        %v415 = vld [vmem:[%s6 + $0x10] sm:$0xff]
        %v416 = vld [vmem:[%s6 + $0x18] sm:$0xff]
        %vm417 = vcmask 130048
        %v419 = vsel %vm417, %v407, 0
        %421 = vmatprep.subr.mxu0 0.0
        %422 = vmatpush1.msra.mxu0 0.0
        %423 = vmatprep.subr.mxu0 0.0
        %424 = vmatpush1.msra.mxu0 0.0
        %425 = vmatprep.subr.mxu0 0.0
        %426 = vmatpush1.msra.mxu0 0.0
        %427 = vmatprep.subr.mxu0 0.0
        %428 = vmatpush1.msra.mxu0 0.0
        %429 = vmatprep.subr.mxu0 0.0
        %430 = vmatpush1.msra.mxu0 0.0
        %431 = vmatprep.subr.mxu0 0.0
        %432 = vmatpush1.msra.mxu0 0.0
        %433 = vmatprep.subr.mxu0 0.0
        %434 = vmatpush1.msra.mxu0 0.0
        %435 = vmatprep.subr.mxu0 0.0
        %436 = vmatpush1.msra.mxu0 0.0
        %437 = vmatprep.subr.mxu0 0.0
        %438 = vmatpush1.msra.mxu0 0.0
        %439 = vmatprep.subr.mxu0 0.0
        %440 = vmatpush1.msra.mxu0 0.0
        %441 = vmatprep.subr.mxu0 0.0
        %442 = vmatpush1.msra.mxu0 0.0
        %443 = vmatprep.subr.mxu0 0.0
        %444 = vmatpush1.msra.mxu0 0.0
        %445 = vmatprep.subr.mxu0 0.0
        %446 = vmatpush1.msra.mxu0 0.0
        %447 = vmatprep.subr.mxu0 0.0
        %448 = vmatpush1.msra.mxu0 0.0
        %449 = vmatprep.subr.mxu0 %v405
        %450 = vmatpush1.msra.mxu0 %v404
        %451 = vmatprep.subr.mxu0 %v403
        %452 = vmatpush1.msra.mxu0 %v402
        %453 = vmatprep.subr.mxu0 0.0
        %454 = vmatpush2.msra.mxu0 0.0
        %455 = vmatprep.subr.mxu0 0.0
        %456 = vmatpush2.msra.mxu0 0.0
        %457 = vmatprep.subr.mxu0 0.0
        %458 = vmatpush2.msra.mxu0 0.0
        %459 = vmatprep.subr.mxu0 0.0
        %460 = vmatpush2.msra.mxu0 0.0
        %461 = vmatprep.subr.mxu0 0.0
        %462 = vmatpush2.msra.mxu0 0.0
        %463 = vmatprep.subr.mxu0 0.0
        %464 = vmatpush2.msra.mxu0 0.0
        %465 = vmatprep.subr.mxu0 0.0
        %466 = vmatpush2.msra.mxu0 0.0
        %467 = vmatprep.subr.mxu0 0.0
        %468 = vmatpush2.msra.mxu0 0.0
        %469 = vmatprep.subr.mxu0 0.0
        %470 = vmatpush2.msra.mxu0 0.0
        %471 = vmatprep.subr.mxu0 0.0
        %472 = vmatpush2.msra.mxu0 0.0
        %473 = vmatprep.subr.mxu0 0.0
        %474 = vmatpush2.msra.mxu0 0.0
        %475 = vmatprep.subr.mxu0 0.0
        %476 = vmatpush2.msra.mxu0 0.0
        %477 = vmatprep.subr.mxu0 0.0
        %478 = vmatpush2.msra.mxu0 0.0
        %479 = vmatprep.subr.mxu0 0.0
        %480 = vmatpush2.msra.mxu0 0.0
        %481 = vmatprep.subr.mxu0 0.0
        %482 = vmatpush2.msra.mxu0 0.0
        %483 = vmatprep.subr.mxu0 0.0
        %484 = vmatpush2.msra.mxu0 0.0
        %485 = vmatprep.mubr.f32.mxu0 0.0
        %486 = vmatmul.mubr.f32.gmra.mxu0 %v419
        %v487 = vpop.f32.mrf.mxu0
        %v488 = vadd.f32 0.0, %v487
        %v489 = vpop.f32.mrf.mxu0
        %v490 = vadd.f32 0.0, %v489
        %491 = vdwg.mxu0
        %vm492 = vcmask 261120
        %v494 = vsel %vm492, %v406, 0
        %496 = vmatprep.subr.mxu0 0.0
        %497 = vmatpush1.msra.mxu0 0.0
        %498 = vmatprep.subr.mxu0 0.0
        %499 = vmatpush1.msra.mxu0 0.0
        %500 = vmatprep.subr.mxu0 0.0
        %501 = vmatpush1.msra.mxu0 0.0
        %502 = vmatprep.subr.mxu0 0.0
        %503 = vmatpush1.msra.mxu0 0.0
        %504 = vmatprep.subr.mxu0 0.0
        %505 = vmatpush1.msra.mxu0 0.0
        %506 = vmatprep.subr.mxu0 0.0
        %507 = vmatpush1.msra.mxu0 0.0
        %508 = vmatprep.subr.mxu0 0.0
        %509 = vmatpush1.msra.mxu0 0.0
        %510 = vmatprep.subr.mxu0 0.0
        %511 = vmatpush1.msra.mxu0 0.0
        %512 = vmatprep.subr.mxu0 0.0
        %513 = vmatpush1.msra.mxu0 0.0
        %514 = vmatprep.subr.mxu0 0.0
        %515 = vmatpush1.msra.mxu0 0.0
        %516 = vmatprep.subr.mxu0 0.0
        %517 = vmatpush1.msra.mxu0 0.0
        %518 = vmatprep.subr.mxu0 0.0
        %519 = vmatpush1.msra.mxu0 0.0
        %520 = vmatprep.subr.mxu0 %v401
        %521 = vmatpush1.msra.mxu0 %v400
        %522 = vmatprep.subr.mxu0 %v399
        %523 = vmatpush1.msra.mxu0 %v398
        %524 = vmatprep.subr.mxu0 %v397
        %525 = vmatpush1.msra.mxu0 %v396
        %526 = vmatprep.subr.mxu0 %v395
        %527 = vmatpush1.msra.mxu0 %v394
        %528 = vmatprep.subr.mxu0 0.0
        %529 = vmatpush2.msra.mxu0 0.0
        %530 = vmatprep.subr.mxu0 0.0
        %531 = vmatpush2.msra.mxu0 0.0
        %532 = vmatprep.subr.mxu0 0.0
        %533 = vmatpush2.msra.mxu0 0.0
        %534 = vmatprep.subr.mxu0 0.0
        %535 = vmatpush2.msra.mxu0 0.0
        %536 = vmatprep.subr.mxu0 0.0
        %537 = vmatpush2.msra.mxu0 0.0
        %538 = vmatprep.subr.mxu0 0.0
        %539 = vmatpush2.msra.mxu0 0.0
        %540 = vmatprep.subr.mxu0 0.0
        %541 = vmatpush2.msra.mxu0 0.0
        %542 = vmatprep.subr.mxu0 0.0
        %543 = vmatpush2.msra.mxu0 0.0
        %544 = vmatprep.subr.mxu0 0.0
        %545 = vmatpush2.msra.mxu0 0.0
        %546 = vmatprep.subr.mxu0 0.0
        %547 = vmatpush2.msra.mxu0 0.0
        %548 = vmatprep.subr.mxu0 0.0
        %549 = vmatpush2.msra.mxu0 0.0
        %550 = vmatprep.subr.mxu0 0.0
        %551 = vmatpush2.msra.mxu0 0.0
        %552 = vmatprep.subr.mxu0 0.0
        %553 = vmatpush2.msra.mxu0 0.0
        %554 = vmatprep.subr.mxu0 0.0
        %555 = vmatpush2.msra.mxu0 0.0
        %556 = vmatprep.subr.mxu0 0.0
        %557 = vmatpush2.msra.mxu0 0.0
        %558 = vmatprep.subr.mxu0 0.0
        %559 = vmatpush2.msra.mxu0 0.0
        %560 = vmatprep.mubr.f32.mxu0 0.0
        %561 = vmatmul.mubr.f32.gmra.mxu0 %v494
        %v562 = vpop.f32.mrf.mxu0
        %v563 = vadd.f32 %v488, %v562
        %v564 = vpop.f32.mrf.mxu0
        %v565 = vadd.f32 %v490, %v564
        %566 = vdwg.mxu0
        %568 = vset.pattern.permute.xlu0 0
        %569 = vperm.xlu0 %568, %v408
        %v570 = vpop.permute.xlu0 %569
        %v572 = vadd.f32 %v563, %v570
        %v573 = vadd.f32 %v565, %v570
        %v574 = vmax.f32 %v572, 0.0
        %v575 = vmax.f32 %v573, 0.0
        %577 = vset.pattern.permute.xlu0 0
        %578 = vperm.xlu0 %577, %v413
        %v579 = vpop.permute.xlu0 %578
        %582 = vset.pattern.permute.xlu0 0
        %583 = vperm.xlu0 %582, %v414
        %v584 = vpop.permute.xlu0 %583
        %587 = vset.pattern.permute.xlu0 0
        %588 = vperm.xlu0 %587, %v415
        %v589 = vpop.permute.xlu0 %588
        %592 = vset.pattern.permute.xlu0 0
        %593 = vperm.xlu0 %592, %v416
        %v594 = vpop.permute.xlu0 %593
        %vm596 = vcmask 64512
        %v598 = vsel %vm596, %v409, 0
        %v601 = vsel %vm596, %v410, 0
        %v604 = vsel %vm596, %v411, 0
        %v607 = vsel %vm596, %v412, 0
        %609 = vmatprep.subr.mxu0 0.0
        %610 = vmatpush1.msra.mxu0 0.0
        %611 = vmatprep.subr.mxu0 0.0
        %612 = vmatpush1.msra.mxu0 0.0
        %613 = vmatprep.subr.mxu0 0.0
        %614 = vmatpush1.msra.mxu0 0.0
        %615 = vmatprep.subr.mxu0 0.0
        %616 = vmatpush1.msra.mxu0 0.0
        %617 = vmatprep.subr.mxu0 0.0
        %618 = vmatpush1.msra.mxu0 0.0
        %619 = vmatprep.subr.mxu0 0.0
        %620 = vmatpush1.msra.mxu0 0.0
        %621 = vmatprep.subr.mxu0 0.0
        %622 = vmatpush1.msra.mxu0 0.0
        %623 = vmatprep.subr.mxu0 0.0
        %624 = vmatpush1.msra.mxu0 0.0
        %625 = vmatprep.subr.mxu0 0.0
        %626 = vmatpush1.msra.mxu0 0.0
        %627 = vmatprep.subr.mxu0 0.0
        %628 = vmatpush1.msra.mxu0 0.0
        %629 = vmatprep.subr.mxu0 0.0
        %630 = vmatpush1.msra.mxu0 0.0
        %631 = vmatprep.subr.mxu0 0.0
        %632 = vmatpush1.msra.mxu0 0.0
        %633 = vmatprep.subr.mxu0 0.0
        %634 = vmatpush1.msra.mxu0 0.0
        %635 = vmatprep.subr.mxu0 0.0
        %636 = vmatpush1.msra.mxu0 0.0
        %637 = vmatprep.subr.mxu0 0.0
        %638 = vmatpush1.msra.mxu0 0.0
        %639 = vmatprep.subr.mxu0 %v575
        %640 = vmatpush1.msra.mxu0 %v574
        %641 = vmatprep.subr.mxu0 0.0
        %642 = vmatpush2.msra.mxu0 0.0
        %643 = vmatprep.subr.mxu0 0.0
        %644 = vmatpush2.msra.mxu0 0.0
        %645 = vmatprep.subr.mxu0 0.0
        %646 = vmatpush2.msra.mxu0 0.0
        %647 = vmatprep.subr.mxu0 0.0
        %648 = vmatpush2.msra.mxu0 0.0
        %649 = vmatprep.subr.mxu0 0.0
        %650 = vmatpush2.msra.mxu0 0.0
        %651 = vmatprep.subr.mxu0 0.0
        %652 = vmatpush2.msra.mxu0 0.0
        %653 = vmatprep.subr.mxu0 0.0
        %654 = vmatpush2.msra.mxu0 0.0
        %655 = vmatprep.subr.mxu0 0.0
        %656 = vmatpush2.msra.mxu0 0.0
        %657 = vmatprep.subr.mxu0 0.0
        %658 = vmatpush2.msra.mxu0 0.0
        %659 = vmatprep.subr.mxu0 0.0
        %660 = vmatpush2.msra.mxu0 0.0
        %661 = vmatprep.subr.mxu0 0.0
        %662 = vmatpush2.msra.mxu0 0.0
        %663 = vmatprep.subr.mxu0 0.0
        %664 = vmatpush2.msra.mxu0 0.0
        %665 = vmatprep.subr.mxu0 0.0
        %666 = vmatpush2.msra.mxu0 0.0
        %667 = vmatprep.subr.mxu0 0.0
        %668 = vmatpush2.msra.mxu0 0.0
        %669 = vmatprep.subr.mxu0 0.0
        %670 = vmatpush2.msra.mxu0 0.0
        %671 = vmatprep.subr.mxu0 0.0
        %672 = vmatpush2.msra.mxu0 0.0
        %673 = vmatprep.mubr.f32.mxu0 0.0
        %674 = vmatmul.mubr.f32.gmra.mxu0 %v598
        %v675 = vpop.f32.mrf.mxu0
        %v676 = vadd.f32 %v579, %v675
        %v677 = vpop.f32.mrf.mxu0
        %v678 = vadd.f32 %v579, %v677
        %679 = vmatprep.mubr.f32.mxu0 0.0
        %680 = vmatmul.mubr.f32.gmra.mxu0 %v601
        %v681 = vpop.f32.mrf.mxu0
        %v682 = vadd.f32 %v584, %v681
        %v683 = vpop.f32.mrf.mxu0
        %v684 = vadd.f32 %v584, %v683
        %685 = vmatprep.mubr.f32.mxu0 0.0
        %686 = vmatmul.mubr.f32.gmra.mxu0 %v604
        %v687 = vpop.f32.mrf.mxu0
        %v688 = vadd.f32 %v589, %v687
        %v689 = vpop.f32.mrf.mxu0
        %v690 = vadd.f32 %v589, %v689
        %691 = vmatprep.mubr.f32.mxu0 0.0
        %692 = vmatmul.mubr.f32.gmra.mxu0 %v607
        %v693 = vpop.f32.mrf.mxu0
        %v694 = vadd.f32 %v594, %v693
        %v695 = vpop.f32.mrf.mxu0
        %v696 = vadd.f32 %v594, %v695
        %697 = vdwg.mxu0
        %v698 = vsub.f32 0.0, %v676
        %v699 = vsub.f32 0.0, %v678
        %v700 = vsub.f32 0.0, %v682
        %v701 = vsub.f32 0.0, %v684
        %v702 = vsub.f32 0.0, %v688
        %v703 = vsub.f32 0.0, %v690
        %v704 = vsub.f32 0.0, %v694
        %v705 = vsub.f32 0.0, %v696
        %v706 = vmul.f32 %v698, 1.442695
        %v707 = vpow.pop %v706
        %v708 = vmul.f32 %v699, 1.442695
        %v709 = vpow.pop %v708
        %v710 = vmul.f32 %v700, 1.442695
        %v711 = vpow.pop %v710
        %v712 = vmul.f32 %v701, 1.442695
        %v713 = vpow.pop %v712
        %v714 = vmul.f32 %v702, 1.442695
        %v715 = vpow.pop %v714
        %v716 = vmul.f32 %v703, 1.442695
        %v717 = vpow.pop %v716
        %v718 = vmul.f32 %v704, 1.442695
        %v719 = vpow.pop %v718
        %v720 = vmul.f32 %v705, 1.442695
        %v721 = vpow.pop %v720
        %v722 = vadd.f32 %v707, 1.0
        %v723 = vadd.f32 %v709, 1.0
        %v724 = vadd.f32 %v711, 1.0
        %v725 = vadd.f32 %v713, 1.0
        %v726 = vadd.f32 %v715, 1.0
        %v727 = vadd.f32 %v717, 1.0
        %v728 = vadd.f32 %v719, 1.0
        %v729 = vadd.f32 %v721, 1.0
        %v730 = vrcp.pop %v722
        %v731 = vrcp.pop %v723
        %v732 = vrcp.pop %v724
        %v733 = vrcp.pop %v725
        %v734 = vrcp.pop %v726
        %v735 = vrcp.pop %v727
        %v736 = vrcp.pop %v728
        %v737 = vrcp.pop %v729
        %v738 = vadd.f32 %v730, 1.0
        %v739 = vadd.f32 %v731, 1.0
        %v740 = vadd.f32 %v732, 1.0
        %v741 = vadd.f32 %v733, 1.0
        %v742 = vadd.f32 %v734, 1.0
        %v743 = vadd.f32 %v735, 1.0
        %v744 = vadd.f32 %v736, 1.0
        %v745 = vadd.f32 %v737, 1.0
        %v746 = vmul.f32 %v394, %v738
        %v747 = vmul.f32 %v395, %v739
        %v748 = vmul.f32 %v396, %v740
        %v749 = vmul.f32 %v397, %v741
        %v750 = vmul.f32 %v398, %v742
        %v751 = vmul.f32 %v399, %v743
        %v752 = vmul.f32 %v400, %v744
        %v753 = vmul.f32 %v401, %v745
        %754 = vst [vmem:[%s373] sm:$0xff] %v746
        %755 = vst [vmem:[%s373 + $0x8] sm:$0xff] %v747
        %756 = vst [vmem:[%s373 + $0x10] sm:$0xff] %v748
        %757 = vst [vmem:[%s373 + $0x18] sm:$0xff] %v749
        %758 = vst [vmem:[%s373 + $0x20] sm:$0xff] %v750
        %759 = vst [vmem:[%s373 + $0x28] sm:$0xff] %v751
        %760 = vst [vmem:[%s373 + $0x30] sm:$0xff] %v752
        %761 = vst [vmem:[%s373 + $0x38] sm:$0xff] %v753
        %v762 = vpack.c.bf16 %v732, %v730
        %v763 = vpack.c.bf16 %v733, %v731
        %v764 = vpack.c.bf16 %v736, %v734
        %v765 = vpack.c.bf16 %v737, %v735
        %v770 = vunpack.c.l.b16 %v762
        %v771 = vunpack.c.l.b16 %v763
        %v772 = vunpack.c.h.b16 %v762
        %v773 = vunpack.c.h.b16 %v763
        %v774 = vunpack.c.l.b16 %v764
        %v775 = vunpack.c.l.b16 %v765
        %v776 = vunpack.c.h.b16 %v764
        %v777 = vunpack.c.h.b16 %v765
        %v778 = vpack.c.b16 %v771, %v770
        %v779 = vpack.c.b16 %v773, %v772
        %v780 = vpack.c.b16 %v775, %v774
        %v781 = vpack.c.b16 %v777, %v776
        %786 = vst [vmem:[%s380] sm:$0xff] %v778
        %787 = vst [vmem:[%s380 + $0x8] sm:$0xff] %v779
        %788 = vst [vmem:[%s380 + $0x10] sm:$0xff] %v780
        %789 = vst [vmem:[%s380 + $0x18] sm:$0xff] %v781
        %s790 = sand.u32 %s212, 1
        %s791 = scalar_lea.sflag [#allocation4], %s790
        %s792 = sand.u32 %s212, 1
        %s793 = smul.addr %s792, 64
        %s794 = scalar_lea.vmem [#allocation5], %s793
        %s795 = sand.u32 %s240, 1
        %s796 = scalar_lea.sflag [#allocation7], %s795
        %s797 = sand.u32 %s240, 1
        %s798 = smul.addr %s797, 32
        %s799 = scalar_lea.vmem [#allocation6], %s798
        // Predicated region
        $region53: #{tpu_custom_call.1} parent=47 // pred_check
          %p800 = pneg %p222
        $region54: #{tpu_custom_call.1} parent=47 // pred_check_branch
          %802 = sbr.rel (%p800) target = $region56
        $region55: #{tpu_custom_call.1} parent=47 // pred_region
          %s803 = smul.u32 2, %s34
          %s805 = ssub.s32 1024, 1024
          %806 = vsyncadd %s791, %s805
          %s807 = smul.addr %s33, 8
          %s808 = sadd.s32 %s803, %s807
          %s809 = smul.addr %s808, 128
          %s810 = scalar_lea.hbm %s7, %s809
          %s811 = sshll.u32 %s794, 4
          %s812 = int_to_ptr.vmem [resolvable:$true] %s811
          %817 = dma.vmem_to_hbm [thread:$0]  %s812, 1024, %s810, %s791, 256, 256, 16
        $region56: #{tpu_custom_call.1} parent=47 // pred_fallthru
          _
        // Predicated region
        $region57: #{tpu_custom_call.1} parent=47 // pred_check
          %p818 = pneg %p250
        $region58: #{tpu_custom_call.1} parent=47 // pred_check_branch
          %820 = sbr.rel (%p818) target = $region60
        $region59: #{tpu_custom_call.1} parent=47 // pred_region
          %s821 = smul.u32 2, %s34
          %s823 = ssub.s32 512, 512
          %824 = vsyncadd %s796, %s823
          %s825 = smul.addr %s33, 8
          %s826 = sadd.s32 %s821, %s825
          %s827 = smul.addr %s826, 64
          %s828 = scalar_lea.hbm %s8, %s827
          %s829 = sshll.u32 %s799, 4
          %s830 = int_to_ptr.vmem [resolvable:$true] %s829
          %835 = dma.vmem_to_hbm [thread:$0]  %s830, 512, %s828, %s796, 128, 128, 8
        $region60: #{tpu_custom_call.1} parent=47 // pred_fallthru
          _
      $region48: #{tpu_custom_call.1} parent=5 // pred_fallthru
        _
      %p836 = scmp.le.s32.totalorder 2, %s24
      // Predicated region
      $region61: #{tpu_custom_call.1} parent=5 // pred_check
        %p837 = pneg %p836
      $region62: #{tpu_custom_call.1} parent=5 // pred_check_branch
        %839 = sbr.rel (%p837) target = $region64
      $region63: #{tpu_custom_call.1} parent=5 // pred_region
        %s840 = ssub.s32 %s24, 2
        // Predicated region
        $region65: #{tpu_custom_call.1} parent=63 // pred_check
          %p841 = pneg %p228
        $region66: #{tpu_custom_call.1} parent=63 // pred_check_branch
          %843 = sbr.rel (%p841) target = $region68
        $region67: #{tpu_custom_call.1} parent=63 // pred_region
          %s844 = sand.u32 %s213, 1
          %s845 = scalar_lea.sflag [#allocation4], %s844
          %s846 = sand.u32 %s213, 1
          %s847 = smul.addr %s846, 64
          %s848 = scalar_lea.vmem [#allocation5], %s847
          %849 = dma.done %s845, 1024
        $region68: #{tpu_custom_call.1} parent=63 // pred_fallthru
          _
        // Predicated region
        $region69: #{tpu_custom_call.1} parent=63 // pred_check
          %p850 = pneg %p256
        $region70: #{tpu_custom_call.1} parent=63 // pred_check_branch
          %852 = sbr.rel (%p850) target = $region72
        $region71: #{tpu_custom_call.1} parent=63 // pred_region
          %s853 = sand.u32 %s241, 1
          %s854 = scalar_lea.sflag [#allocation7], %s853
          %s855 = sand.u32 %s241, 1
          %s856 = smul.addr %s855, 32
          %s857 = scalar_lea.vmem [#allocation6], %s856
          %858 = dma.done %s854, 512
        $region72: #{tpu_custom_call.1} parent=63 // pred_fallthru
          _
      $region64: #{tpu_custom_call.1} parent=5 // pred_fallthru
        _
    $region6: #{tpu_custom_call.1} parent=1 // loop_footer
      %s28 = sadd.s32 1, %s24
    $region7: #{tpu_custom_call.1} parent=1 // loop_footer_branch
      %23 = sbr.rel target = $region3
    $region8: #{tpu_custom_call.1} parent=1 // loop_exit
      _
    %859 = vsyncpa [#allocation3], 1
    %s860 = scalar_lea.sflag [#allocation3], 1
    %861 = vsyncpa %s860, 1
    %862 = vsyncpa [#allocation4], 1
    %s863 = scalar_lea.sflag [#allocation4], 1
    %864 = vsyncpa %s863, 1
    %865 = vsyncpa [#allocation7], 1
    %s866 = scalar_lea.sflag [#allocation7], 1
    %867 = vsyncpa %s866, 1

</llo_original>
